<compile_context>
chip_gen: v7x
topology: tpu7x:2x2x1
jax: 0.10.0
libtpu: 0.0.40
codegen_flags: <defaults>
</compile_context>

<pallas_src>
import functools
import math

import jax
import jax.numpy as jnp
from jax.experimental import pallas as pl
from jax.experimental.pallas import tpu as pltpu


def _round_up(n, m):
    return ((n + m - 1) // m) * m


def _mlp_kernel(num_layers, x_ref, *refs):
    """refs = (w1, b1, w2, b2, ..., wL, bL, o_ref).

    x_ref:  (d_in, bm)      feature-major input tile (batch on the lane axis)
    w_i:    (out_i, in_i)   torch layout, resident (constant index_map)
    b_i:    (out_i, 1)
    o_ref:  (d_out, bm)
    """
    o_ref = refs[-1]
    a = x_ref[...]                                   # (d_in, bm)
    for i in range(num_layers):
        w = refs[2 * i][...]                         # (out, in)
        b = refs[2 * i + 1][...]                     # (out, 1) -> broadcast over lanes
        z = jnp.dot(w, a, preferred_element_type=jnp.float32) + b
        a = jnp.tanh(z) if i < num_layers - 1 else z  # last layer: no activation
    o_ref[...] = a.astype(o_ref.dtype)               # (1, bm): lane-dense store


def mlp_forward(x, weights, biases, *, block_m=16384,
                vmem_limit_bytes=32 * 1024 * 1024):
    """NN.forward(x): chain of Linear(+Tanh), last Linear without activation.

    x:          (N, layers[0]) float32
    weights[i]: (layers[i+1], layers[i]) float32   (PyTorch layout: out, in)
    biases[i]:  (layers[i+1],) float32
    returns:    (N, layers[-1]) float32
    """
    x = jnp.asarray(x, jnp.float32)
    weights = [jnp.asarray(w, jnp.float32) for w in weights]
    biases = [jnp.asarray(b, jnp.float32) for b in biases]

    num_layers = len(weights)
    N, d_in = x.shape
    d_out = weights[-1].shape[0]

    # Batch tile along the lane axis: multiple of 128, as large as requested,
    # with an even number of grid steps (>= 2) when the batch allows it so
    # both TensorCores of a v7x chip stay busy.
    if N <= 128:
        bm = 128
    else:
        steps = max(pl.cdiv(N, block_m), 2)
        if steps % 2:
            steps += 1
        bm = _round_up(pl.cdiv(N, steps), 128)
    N_pad = _round_up(N, bm)
    grid_n = N_pad // bm

    # Feature-major plumbing: (N, d_in) -> (d_in, N_pad).  The transpose (and
    # the pad, only when N % bm != 0) is wrapper-side layout work; under jit
    # XLA fuses it into a single pass over x.
    x_t = x.T
    if N_pad != N:
        x_t = jnp.pad(x_t, ((0, 0), (0, N_pad - N)))   # padded cols are zeros

    params = []
    in_specs = [pl.BlockSpec((d_in, bm), lambda i: (0, i))]
    for w, b in zip(weights, biases):
        b2 = b.reshape(-1, 1)
        params += [w, b2]
        # Constant (0, 0) index_map -> fetched once, resident across grid steps.
        # (pipeline_mode=pl.Buffered(1) would shave the redundant second buffer,
        #  but the params are only a few KiB so it is left at the default.)
        in_specs += [
            pl.BlockSpec(w.shape, lambda i: (0, 0)),
            pl.BlockSpec(b2.shape, lambda i: (0, 0)),
        ]

    out_spec = pl.BlockSpec((d_out, bm), lambda i: (0, i))

    out_t = pl.pallas_call(
        functools.partial(_mlp_kernel, num_layers),
        out_shape=jax.ShapeDtypeStruct((d_out, N_pad), jnp.float32),
        grid_spec=pltpu.PrefetchScalarGridSpec(
            num_scalar_prefetch=0,
            grid=(grid_n,),
            in_specs=in_specs,
            out_specs=out_spec,
        ),
        compiler_params=pltpu.CompilerParams(
            dimension_semantics=("parallel",),
            vmem_limit_bytes=vmem_limit_bytes,
        ),
    )(x_t, *params)

    # Back to the module's (N, d_out) row-major output.
    out_t = out_t if N_pad == N else out_t[:, :N]
    return out_t.T


def init_params(layers, key):
    """Xavier-normal weights (gain=1), zero biases — mirrors NN.__init__.

    Weights are stored in the PyTorch (out_features, in_features) layout.
    """
    weights, biases = [], []
    for i in range(len(layers) - 1):
        key, sub = jax.random.split(key)
        fan_in, fan_out = layers[i], layers[i + 1]
        std = math.sqrt(2.0 / (fan_in + fan_out))
        w = std * jax.random.normal(sub, (fan_out, fan_in), dtype=jnp.float32)
        b = jnp.zeros((fan_out,), dtype=jnp.float32)
        weights.append(w)
        biases.append(b)
    return weights, biases


def mlp_forward_ref(x, weights, biases):
    """Plain-JAX reference of NN.forward for validation (torch-layout weights)."""
    a = x
    for i, (w, b) in enumerate(zip(weights, biases)):
        z = a @ w.T + b[None, :]
        a = jnp.tanh(z) if i < len(weights) - 1 else z
    return a


# TODO(synk): lossR / lossICBC / loss use torch.autograd PDE residuals + MSE;
# only the forward pass (the hot path) is implemented as a Pallas kernel.

if __name__ == "__main__":
    layers = [2, 32, 32, 1]          # PINN for Burgers: (x, t) -> u
    key = jax.random.PRNGKey(0)
    key, kx1, kx2 = jax.random.split(key, 3)

    weights, biases = init_params(layers, key)

    fwd = jax.jit(lambda xx: mlp_forward(xx, weights, biases))

    # Small demo batch of (x, t) collocation points.
    x_small = jax.random.uniform(kx1, (16, layers[0]), dtype=jnp.float32,
                                 minval=-1.0, maxval=1.0)
    out_small = jax.block_until_ready(fwd(x_small))
    ref_small = mlp_forward_ref(x_small, weights, biases)
    assert out_small.shape == (16, layers[-1])
    assert jnp.allclose(out_small, ref_small, atol=1e-4, rtol=1e-4), \
        "small-batch mismatch vs reference"

    # Larger batch not divisible by the tile: exercises padding + an even
    # multi-step grid.
    x_med = jax.random.uniform(kx2, (300, layers[0]), dtype=jnp.float32,
                               minval=-1.0, maxval=1.0)
    out_med = jax.block_until_ready(fwd(x_med))
    ref_med = mlp_forward_ref(x_med, weights, biases)
    assert out_med.shape == (300, layers[-1])
    assert jnp.allclose(out_med, ref_med, atol=1e-4, rtol=1e-4), \
        "medium-batch mismatch vs reference"

    print("KERNEL_OK")
</pallas_src>

<mosaic_0001>
module attributes {stable_mosaic.version = 11 : i64} {
  func.func @_mlp_kernel(%arg0: i32, %arg1: memref<2x128xf32, #tpu.memory_space<vmem>>, %arg2: memref<32x2xf32, #tpu.memory_space<vmem>>, %arg3: memref<32x1xf32, #tpu.memory_space<vmem>>, %arg4: memref<32x32xf32, #tpu.memory_space<vmem>>, %arg5: memref<32x1xf32, #tpu.memory_space<vmem>>, %arg6: memref<1x32xf32, #tpu.memory_space<vmem>>, %arg7: memref<1x1xf32, #tpu.memory_space<vmem>>, %arg8: memref<1x128xf32, #tpu.memory_space<vmem>>) attributes {dimension_semantics = [#tpu.dimension_semantics<parallel>], iteration_bounds = array<i64: 1>, scalar_prefetch = 0 : i64, scratch_operands = 0 : i64, tpu.core_type = #tpu.core_type<tc>, window_params = [{transform_indices = @transform_0, window_bounds = array<i64: 2, 128>}, {pipeline_mode = #tpu.pipeline_mode<synchronous>, transform_indices = @transform_1, window_bounds = array<i64: 32, 2>}, {pipeline_mode = #tpu.pipeline_mode<synchronous>, transform_indices = @transform_2, window_bounds = array<i64: 32, 1>}, {pipeline_mode = #tpu.pipeline_mode<synchronous>, transform_indices = @transform_3, window_bounds = array<i64: 32, 32>}, {pipeline_mode = #tpu.pipeline_mode<synchronous>, transform_indices = @transform_4, window_bounds = array<i64: 32, 1>}, {pipeline_mode = #tpu.pipeline_mode<synchronous>, transform_indices = @transform_5, window_bounds = array<i64: 1, 32>}, {pipeline_mode = #tpu.pipeline_mode<synchronous>, transform_indices = @transform_6, window_bounds = array<i64: 1, 1>}, {transform_indices = @transform_7, window_bounds = array<i64: 1, 128>}]} {
    %c0 = arith.constant 0 : index
    %c0_0 = arith.constant 0 : index
    %0 = vector.load %arg1[%c0, %c0_0] : memref<2x128xf32, #tpu.memory_space<vmem>>, vector<2x128xf32>
    %c0_1 = arith.constant 0 : index
    %c0_2 = arith.constant 0 : index
    %1 = vector.load %arg2[%c0_1, %c0_2] : memref<32x2xf32, #tpu.memory_space<vmem>>, vector<32x2xf32>
    %c0_3 = arith.constant 0 : index
    %c0_4 = arith.constant 0 : index
    %2 = vector.load %arg3[%c0_3, %c0_4] : memref<32x1xf32, #tpu.memory_space<vmem>>, vector<32x1xf32>
    %cst = arith.constant dense<0.000000e+00> : vector<32x128xf32>
    %3 = tpu.matmul %1, %0, %cst {dimension_numbers = #tpu.dot_dimension_numbers<[1], [0], [0], [1], [0, 0, 1, 1], [], []>} : vector<32x2xf32>, vector<2x128xf32>, vector<32x128xf32> -> vector<32x128xf32>
    %4 = vector.broadcast %2 : vector<32x1xf32> to vector<32x128xf32>
    %5 = arith.addf %3, %4 : vector<32x128xf32>
    %6 = math.tanh %5 : vector<32x128xf32>
    %c0_5 = arith.constant 0 : index
    %c0_6 = arith.constant 0 : index
    %7 = vector.load %arg4[%c0_5, %c0_6] : memref<32x32xf32, #tpu.memory_space<vmem>>, vector<32x32xf32>
    %c0_7 = arith.constant 0 : index
    %c0_8 = arith.constant 0 : index
    %8 = vector.load %arg5[%c0_7, %c0_8] : memref<32x1xf32, #tpu.memory_space<vmem>>, vector<32x1xf32>
    %cst_9 = arith.constant dense<0.000000e+00> : vector<32x128xf32>
    %9 = tpu.matmul %7, %6, %cst_9 {dimension_numbers = #tpu.dot_dimension_numbers<[1], [0], [0], [1], [0, 0, 1, 1], [], []>} : vector<32x32xf32>, vector<32x128xf32>, vector<32x128xf32> -> vector<32x128xf32>
    %10 = vector.broadcast %8 : vector<32x1xf32> to vector<32x128xf32>
    %11 = arith.addf %9, %10 : vector<32x128xf32>
    %12 = math.tanh %11 : vector<32x128xf32>
    %c0_10 = arith.constant 0 : index
    %c0_11 = arith.constant 0 : index
    %13 = vector.load %arg6[%c0_10, %c0_11] : memref<1x32xf32, #tpu.memory_space<vmem>>, vector<1x32xf32>
    %c0_12 = arith.constant 0 : index
    %c0_13 = arith.constant 0 : index
    %14 = vector.load %arg7[%c0_12, %c0_13] : memref<1x1xf32, #tpu.memory_space<vmem>>, vector<1x1xf32>
    %cst_14 = arith.constant dense<0.000000e+00> : vector<1x128xf32>
    %15 = tpu.matmul %13, %12, %cst_14 {dimension_numbers = #tpu.dot_dimension_numbers<[1], [0], [0], [1], [0, 0, 1, 1], [], []>} : vector<1x32xf32>, vector<32x128xf32>, vector<1x128xf32> -> vector<1x128xf32>
    %16 = vector.broadcast %14 : vector<1x1xf32> to vector<1x128xf32>
    %17 = arith.addf %15, %16 : vector<1x128xf32>
    %c0_15 = arith.constant 0 : index
    %c0_16 = arith.constant 0 : index
    %18 = vector.load %arg8[%c0_15, %c0_16] : memref<1x128xf32, #tpu.memory_space<vmem>>, vector<1x128xf32>
    tpu.vector_store %arg8[%c0_15, %c0_16], %17 {strides = array<i32>} : memref<1x128xf32, #tpu.memory_space<vmem>>, vector<1x128xf32>,
    return
  }
  func.func @transform_0(%arg0: i32) -> (i32, i32) {
    %c0_i32 = arith.constant 0 : i32
    %c0_i32_0 = arith.constant 0 : i32
    return %c0_i32, %arg0 : i32, i32
  }
  func.func @transform_1(%arg0: i32) -> (i32, i32) {
    %c0_i32 = arith.constant 0 : i32
    %c0_i32_0 = arith.constant 0 : i32
    %c0_i32_1 = arith.constant 0 : i32
    return %c0_i32, %c0_i32_0 : i32, i32
  }
  func.func @transform_2(%arg0: i32) -> (i32, i32) {
    %c0_i32 = arith.constant 0 : i32
    %c0_i32_0 = arith.constant 0 : i32
    %c0_i32_1 = arith.constant 0 : i32
    return %c0_i32, %c0_i32_0 : i32, i32
  }
  func.func @transform_3(%arg0: i32) -> (i32, i32) {
    %c0_i32 = arith.constant 0 : i32
    %c0_i32_0 = arith.constant 0 : i32
    %c0_i32_1 = arith.constant 0 : i32
    return %c0_i32, %c0_i32_0 : i32, i32
  }
  func.func @transform_4(%arg0: i32) -> (i32, i32) {
    %c0_i32 = arith.constant 0 : i32
    %c0_i32_0 = arith.constant 0 : i32
    %c0_i32_1 = arith.constant 0 : i32
    return %c0_i32, %c0_i32_0 : i32, i32
  }
  func.func @transform_5(%arg0: i32) -> (i32, i32) {
    %c0_i32 = arith.constant 0 : i32
    %c0_i32_0 = arith.constant 0 : i32
    %c0_i32_1 = arith.constant 0 : i32
    return %c0_i32, %c0_i32_0 : i32, i32
  }
  func.func @transform_6(%arg0: i32) -> (i32, i32) {
    %c0_i32 = arith.constant 0 : i32
    %c0_i32_0 = arith.constant 0 : i32
    %c0_i32_1 = arith.constant 0 : i32
    return %c0_i32, %c0_i32_0 : i32, i32
  }
  func.func @transform_7(%arg0: i32) -> (i32, i32) {
    %c0_i32 = arith.constant 0 : i32
    %c0_i32_0 = arith.constant 0 : i32
    return %c0_i32, %arg0 : i32, i32
  }
}

</mosaic_0001>

<llo_original>
// kernel: _lambda_.1
$region0: #{_lambda_.1}
  #allocation0 [shape = 'u32[]', space=smem, size = 0x4, offset = 0x4, fixed_abs, tag = 'smem constant byte address 0x4 - core index']
  #allocation1 [shape = 'u32[144,128]{1,0:T(1,128)}', space=vmem, size = 0x12000, scoped, tag = 'internal scratch']
  #allocation2 [shape = 'f32[1,1]{1,0:T(1,128)S(1)}', space=vmem, size = 0x200, scoped, tag = 'scoped memory for _lambda_.1']
  %s0 = inlined_call_operand.vmem [shape: f32[2,128], index: 0, kind: input, shape index: {}]
  %s1 = inlined_call_operand.hbm [shape: f32[32,2], index: 1, kind: input, shape index: {}]
  %s2 = inlined_call_operand.vmem [shape: f32[32,1], index: 2, kind: input, shape index: {}, may-alias: {2,4}]
  %s3 = inlined_call_operand.vmem [shape: f32[32,32], index: 3, kind: input, shape index: {}]
  %s4 = inlined_call_operand.vmem [shape: f32[32,1], index: 4, kind: input, shape index: {}, may-alias: {2,4}]
  %s5 = inlined_call_operand.vmem [shape: f32[1,32], index: 5, kind: input, shape index: {}]
  %s6 = inlined_call_operand.<no memory space> [shape: f32[1,1], index: 6, kind: input, shape index: {}]
  %s7 = inlined_call_operand.vmem [shape: f32[1,128], index: 7, kind: output, shape index: {}]
  %s8 = sld [smem:[#allocation0]]
  $region42: #{_lambda_.1} parent=0
    _
  %s10 = ssub.s32 1, %s8
  %s11 = scalar_select 0, %s10, %s8
  %v12 = vstv %s6
  %13 = vst [vmem:[#allocation2] sm:$0x1] %v12
  $region1: #{_lambda_.1} parent=0
    #allocation3 [shape = 'u8[16384]{0}', space=vmem, size = 0x4000, scoped, tag = 'input window, operand 1, single buffered']
    #allocation4 [shape = 's32[1]{0}', space=sflag, size = 0x4, scoped, tag = 'scoped memory for _lambda_.1']
    %14 = vsyncpa [#allocation4], 0
    // Predicated region
    $region2: #{_lambda_.1} parent=1 // pred_check
      _
    $region3: #{_lambda_.1} parent=1 // pred_check_branch
      %16 = sbr.rel (0) target = $region5
    $region4: #{_lambda_.1} parent=1 // pred_region
      _
    $region5: #{_lambda_.1} parent=1 // pred_fallthru
      _
    // Predicated region
    $region6: #{_lambda_.1} parent=1 // pred_check
      _
    $region7: #{_lambda_.1} parent=1 // pred_check_branch
      %18 = sbr.rel (0) target = $region9
    $region8: #{_lambda_.1} parent=1 // pred_region
      %s20 = ssub.s32 512, 512
      %21 = vsyncadd [#allocation4], %s20
      %s22 = sshll.u32 [#allocation3], 4
      %s23 = int_to_ptr.vmem [resolvable:$true] %s22
      %28 = dma.hbm_to_vmem [thread:$0]  %s1, 512, %s23, [#allocation4], 128, 128, 8
    $region9: #{_lambda_.1} parent=1 // pred_fallthru
      _
    // Predicated region
    $region10: #{_lambda_.1} parent=1 // pred_check
      _
    $region11: #{_lambda_.1} parent=1 // pred_check_branch
      %30 = sbr.rel (0) target = $region13
    $region12: #{_lambda_.1} parent=1 // pred_region
      _
    $region13: #{_lambda_.1} parent=1 // pred_fallthru
      _
    // Predicated region
    $region14: #{_lambda_.1} parent=1 // pred_check
      _
    $region15: #{_lambda_.1} parent=1 // pred_check_branch
      %32 = sbr.rel (0) target = $region17
    $region16: #{_lambda_.1} parent=1 // pred_region
      _
    $region17: #{_lambda_.1} parent=1 // pred_fallthru
      _
    // Predicated region
    $region18: #{_lambda_.1} parent=1 // pred_check
      _
    $region19: #{_lambda_.1} parent=1 // pred_check_branch
      %34 = sbr.rel (0) target = $region21
    $region20: #{_lambda_.1} parent=1 // pred_region
      _
    $region21: #{_lambda_.1} parent=1 // pred_fallthru
      _
    // Predicated region
    $region22: #{_lambda_.1} parent=1 // pred_check
      _
    $region23: #{_lambda_.1} parent=1 // pred_check_branch
      %36 = sbr.rel (0) target = $region25
    $region24: #{_lambda_.1} parent=1 // pred_region
      _
    $region25: #{_lambda_.1} parent=1 // pred_fallthru
      _
    // Predicated region
    $region26: #{_lambda_.1} parent=1 // pred_check
      _
    $region27: #{_lambda_.1} parent=1 // pred_check_branch
      %38 = sbr.rel (0) target = $region29
    $region28: #{_lambda_.1} parent=1 // pred_region
      _
    $region29: #{_lambda_.1} parent=1 // pred_fallthru
      _
    // Predicated region
    $region30: #{_lambda_.1} parent=1 // pred_check
      _
    $region31: #{_lambda_.1} parent=1 // pred_check_branch
      %40 = sbr.rel (0) target = $region33
    $region32: #{_lambda_.1} parent=1 // pred_region
      %41 = dma.done [#allocation4], 512
    $region33: #{_lambda_.1} parent=1 // pred_fallthru
      _
    %v42 = vld [vmem:[%s0] sm:$0x3]
    %v43 = vld [vmem:[#allocation3] sm:$0xff]
    %v44 = vld [vmem:[#allocation3 + $0x8] sm:$0xff]
    %v45 = vld [vmem:[#allocation3 + $0x10] sm:$0xff]
    %v46 = vld [vmem:[#allocation3 + $0x18] sm:$0xff]
    %v47 = vld [vmem:[%s2] sm:$0xff]
    %v48 = vld [vmem:[%s2 + $0x8] sm:$0xff]
    %v49 = vld [vmem:[%s2 + $0x10] sm:$0xff]
    %v50 = vld [vmem:[%s2 + $0x18] sm:$0xff]
    %52 = vset.pattern.permute.xlu0 0
    %53 = vperm.xlu0 %52, %v47
    %v54 = vpop.permute.xlu0 %53
    %57 = vset.pattern.permute.xlu0 0
    %58 = vperm.xlu0 %57, %v48
    %v59 = vpop.permute.xlu0 %58
    %62 = vset.pattern.permute.xlu0 0
    %63 = vperm.xlu0 %62, %v49
    %v64 = vpop.permute.xlu0 %63
    %67 = vset.pattern.permute.xlu0 0
    %68 = vperm.xlu0 %67, %v50
    %v69 = vpop.permute.xlu0 %68
    %vm71 = vcmask 15360
    %v73 = vsel %vm71, %v43, 0
    %v76 = vsel %vm71, %v44, 0
    %v79 = vsel %vm71, %v45, 0
    %v82 = vsel %vm71, %v46, 0
    %vm84 = vcmask 1041408
    %v86 = vsel %vm84, %v42, 0
    %88 = vmatprep.subr.mxu0 0.0
    %89 = vmatpush1.msra.mxu0 %v86
    %90 = vmatprep.subr.mxu0 0.0
    %91 = vmatpush1.msra.mxu0 0.0
    %92 = vmatprep.subr.mxu0 0.0
    %93 = vmatpush1.msra.mxu0 0.0
    %94 = vmatprep.subr.mxu0 0.0
    %95 = vmatpush1.msra.mxu0 0.0
    %96 = vmatprep.subr.mxu0 0.0
    %97 = vmatpush1.msra.mxu0 0.0
    %98 = vmatprep.subr.mxu0 0.0
    %99 = vmatpush1.msra.mxu0 0.0
    %100 = vmatprep.subr.mxu0 0.0
    %101 = vmatpush1.msra.mxu0 0.0
    %102 = vmatprep.subr.mxu0 0.0
    %103 = vmatpush1.msra.mxu0 0.0
    %104 = vmatprep.subr.mxu0 0.0
    %105 = vmatpush1.msra.mxu0 0.0
    %106 = vmatprep.subr.mxu0 0.0
    %107 = vmatpush1.msra.mxu0 0.0
    %108 = vmatprep.subr.mxu0 0.0
    %109 = vmatpush1.msra.mxu0 0.0
    %110 = vmatprep.subr.mxu0 0.0
    %111 = vmatpush1.msra.mxu0 0.0
    %112 = vmatprep.subr.mxu0 0.0
    %113 = vmatpush1.msra.mxu0 0.0
    %114 = vmatprep.subr.mxu0 0.0
    %115 = vmatpush1.msra.mxu0 0.0
    %116 = vmatprep.subr.mxu0 0.0
    %117 = vmatpush1.msra.mxu0 0.0
    %118 = vmatprep.subr.mxu0 0.0
    %119 = vmatpush1.msra.mxu0 0.0
    %120 = vmatprep.subr.mxu0 0.0
    %121 = vmatpush1.msra.mxu0 0.0
    %122 = vmatprep.subr.mxu0 0.0
    %123 = vmatpush1.msra.mxu0 0.0
    %124 = vmatprep.subr.mxu0 0.0
    %125 = vmatpush1.msra.mxu0 0.0
    %126 = vmatprep.subr.mxu0 0.0
    %127 = vmatpush1.msra.mxu0 0.0
    %128 = vmatprep.subr.mxu0 0.0
    %129 = vmatpush1.msra.mxu0 0.0
    %130 = vmatprep.subr.mxu0 0.0
    %131 = vmatpush1.msra.mxu0 0.0
    %132 = vmatprep.subr.mxu0 0.0
    %133 = vmatpush1.msra.mxu0 0.0
    %134 = vmatprep.subr.mxu0 0.0
    %135 = vmatpush1.msra.mxu0 0.0
    %136 = vmatprep.subr.mxu0 0.0
    %137 = vmatpush1.msra.mxu0 0.0
    %138 = vmatprep.subr.mxu0 0.0
    %139 = vmatpush1.msra.mxu0 0.0
    %140 = vmatprep.subr.mxu0 0.0
    %141 = vmatpush1.msra.mxu0 0.0
    %142 = vmatprep.subr.mxu0 0.0
    %143 = vmatpush1.msra.mxu0 0.0
    %144 = vmatprep.subr.mxu0 0.0
    %145 = vmatpush1.msra.mxu0 0.0
    %146 = vmatprep.subr.mxu0 0.0
    %147 = vmatpush1.msra.mxu0 0.0
    %148 = vmatprep.subr.mxu0 0.0
    %149 = vmatpush1.msra.mxu0 0.0
    %150 = vmatprep.subr.mxu0 0.0
    %151 = vmatpush1.msra.mxu0 0.0
    %152 = vmatprep.mubr.f32.mxu0 0.0
    %153 = vmatmul.mubr.f32.gmra.mrb[0].mxu0 %v73
    %v154 = vpop.f32.mrb[0].mxu0
    %v155 = vadd.f32 %v54, %v154
    %v156 = vpop.f32.mrb[0].mxu0
    %157 = vmatprep.mubr.f32.mxu0 0.0
    %158 = vmatmul.mubr.f32.gmra.mrb[0].mxu0 %v76
    %v159 = vpop.f32.mrb[0].mxu0
    %v160 = vadd.f32 %v59, %v159
    %v161 = vpop.f32.mrb[0].mxu0
    %162 = vmatprep.mubr.f32.mxu0 0.0
    %163 = vmatmul.mubr.f32.gmra.mrb[0].mxu0 %v79
    %v164 = vpop.f32.mrb[0].mxu0
    %v165 = vadd.f32 %v64, %v164
    %v166 = vpop.f32.mrb[0].mxu0
    %167 = vmatprep.mubr.f32.mxu0 0.0
    %168 = vmatmul.mubr.f32.gmra.mrb[0].mxu0 %v82
    %v169 = vpop.f32.mrb[0].mxu0
    %v170 = vadd.f32 %v69, %v169
    %v171 = vpop.f32.mrb[0].mxu0
    %172 = vdwg.mxu0
    %v173 = vtanh.pop %v155
    %v174 = vtanh.pop %v160
    %v175 = vtanh.pop %v165
    %v176 = vtanh.pop %v170
    %v177 = vld [vmem:[%s3] sm:$0xff]
    %v178 = vld [vmem:[%s3 + $0x8] sm:$0xff]
    %v179 = vld [vmem:[%s3 + $0x10] sm:$0xff]
    %v180 = vld [vmem:[%s3 + $0x18] sm:$0xff]
    %v181 = vld [vmem:[%s4] sm:$0xff]
    %v182 = vld [vmem:[%s4 + $0x8] sm:$0xff]
    %v183 = vld [vmem:[%s4 + $0x10] sm:$0xff]
    %v184 = vld [vmem:[%s4 + $0x18] sm:$0xff]
    %186 = vset.pattern.permute.xlu0 0
    %187 = vperm.xlu0 %186, %v181
    %v188 = vpop.permute.xlu0 %187
    %191 = vset.pattern.permute.xlu0 0
    %192 = vperm.xlu0 %191, %v182
    %v193 = vpop.permute.xlu0 %192
    %196 = vset.pattern.permute.xlu0 0
    %197 = vperm.xlu0 %196, %v183
    %v198 = vpop.permute.xlu0 %197
    %201 = vset.pattern.permute.xlu0 0
    %202 = vperm.xlu0 %201, %v184
    %v203 = vpop.permute.xlu0 %202
    %vm205 = vcmask 261120
    %v207 = vsel %vm205, %v177, 0
    %v210 = vsel %vm205, %v178, 0
    %v213 = vsel %vm205, %v179, 0
    %v216 = vsel %vm205, %v180, 0
    %218 = vmatprep.subr.mxu0 0.0
    %219 = vmatpush1.msra.mxu0 %v173
    %220 = vmatprep.subr.mxu0 0.0
    %221 = vmatpush1.msra.mxu0 %v174
    %222 = vmatprep.subr.mxu0 0.0
    %223 = vmatpush1.msra.mxu0 %v175
    %224 = vmatprep.subr.mxu0 0.0
    %225 = vmatpush1.msra.mxu0 %v176
    %226 = vmatprep.subr.mxu0 0.0
    %227 = vmatpush1.msra.mxu0 0.0
    %228 = vmatprep.subr.mxu0 0.0
    %229 = vmatpush1.msra.mxu0 0.0
    %230 = vmatprep.subr.mxu0 0.0
    %231 = vmatpush1.msra.mxu0 0.0
    %232 = vmatprep.subr.mxu0 0.0
    %233 = vmatpush1.msra.mxu0 0.0
    %234 = vmatprep.subr.mxu0 0.0
    %235 = vmatpush1.msra.mxu0 0.0
    %236 = vmatprep.subr.mxu0 0.0
    %237 = vmatpush1.msra.mxu0 0.0
    %238 = vmatprep.subr.mxu0 0.0
    %239 = vmatpush1.msra.mxu0 0.0
    %240 = vmatprep.subr.mxu0 0.0
    %241 = vmatpush1.msra.mxu0 0.0
    %242 = vmatprep.subr.mxu0 0.0
    %243 = vmatpush1.msra.mxu0 0.0
    %244 = vmatprep.subr.mxu0 0.0
    %245 = vmatpush1.msra.mxu0 0.0
    %246 = vmatprep.subr.mxu0 0.0
    %247 = vmatpush1.msra.mxu0 0.0
    %248 = vmatprep.subr.mxu0 0.0
    %249 = vmatpush1.msra.mxu0 0.0
    %250 = vmatprep.subr.mxu0 0.0
    %251 = vmatpush1.msra.mxu0 0.0
    %252 = vmatprep.subr.mxu0 0.0
    %253 = vmatpush1.msra.mxu0 0.0
    %254 = vmatprep.subr.mxu0 0.0
    %255 = vmatpush1.msra.mxu0 0.0
    %256 = vmatprep.subr.mxu0 0.0
    %257 = vmatpush1.msra.mxu0 0.0
    %258 = vmatprep.subr.mxu0 0.0
    %259 = vmatpush1.msra.mxu0 0.0
    %260 = vmatprep.subr.mxu0 0.0
    %261 = vmatpush1.msra.mxu0 0.0
    %262 = vmatprep.subr.mxu0 0.0
    %263 = vmatpush1.msra.mxu0 0.0
    %264 = vmatprep.subr.mxu0 0.0
    %265 = vmatpush1.msra.mxu0 0.0
    %266 = vmatprep.subr.mxu0 0.0
    %267 = vmatpush1.msra.mxu0 0.0
    %268 = vmatprep.subr.mxu0 0.0
    %269 = vmatpush1.msra.mxu0 0.0
    %270 = vmatprep.subr.mxu0 0.0
    %271 = vmatpush1.msra.mxu0 0.0
    %272 = vmatprep.subr.mxu0 0.0
    %273 = vmatpush1.msra.mxu0 0.0
    %274 = vmatprep.subr.mxu0 0.0
    %275 = vmatpush1.msra.mxu0 0.0
    %276 = vmatprep.subr.mxu0 0.0
    %277 = vmatpush1.msra.mxu0 0.0
    %278 = vmatprep.subr.mxu0 0.0
    %279 = vmatpush1.msra.mxu0 0.0
    %280 = vmatprep.subr.mxu0 0.0
    %281 = vmatpush1.msra.mxu0 0.0
    %282 = vmatprep.mubr.f32.mxu0 0.0
    %283 = vmatmul.mubr.f32.gmra.mrb[0].mxu0 %v207
    %v284 = vpop.f32.mrb[0].mxu0
    %v285 = vadd.f32 %v188, %v284
    %v286 = vpop.f32.mrb[0].mxu0
    %287 = vmatprep.mubr.f32.mxu0 0.0
    %288 = vmatmul.mubr.f32.gmra.mrb[0].mxu0 %v210
    %v289 = vpop.f32.mrb[0].mxu0
    %v290 = vadd.f32 %v193, %v289
    %v291 = vpop.f32.mrb[0].mxu0
    %292 = vmatprep.mubr.f32.mxu0 0.0
    %293 = vmatmul.mubr.f32.gmra.mrb[0].mxu0 %v213
    %v294 = vpop.f32.mrb[0].mxu0
    %v295 = vadd.f32 %v198, %v294
    %v296 = vpop.f32.mrb[0].mxu0
    %297 = vmatprep.mubr.f32.mxu0 0.0
    %298 = vmatmul.mubr.f32.gmra.mrb[0].mxu0 %v216
    %v299 = vpop.f32.mrb[0].mxu0
    %v300 = vadd.f32 %v203, %v299
    %v301 = vpop.f32.mrb[0].mxu0
    %302 = vdwg.mxu0
    %v303 = vtanh.pop %v285
    %v304 = vtanh.pop %v290
    %v305 = vtanh.pop %v295
    %v306 = vtanh.pop %v300
    %v307 = vld [vmem:[%s5] sm:$0x1]
    %v308 = vld [vmem:[#allocation2] sm:$0x1]
    %310 = vset.pattern.permute.xlu0 0
    %311 = vperm.xlu0 %310, %v308
    %v312 = vpop.permute.xlu0 %311
    %v314 = vlaneseq
    %v315 = vshrl.u32 %v314, 7
    %v316 = vsub.s32 0, %v315
    %v317 = vrot.slane %v312, %v316
    %v319 = vsel %vm205, %v307, 0
    %321 = vmatprep.subr.mxu0 0.0
    %322 = vmatpush1.msra.mxu0 %v303
    %323 = vmatprep.subr.mxu0 0.0
    %324 = vmatpush1.msra.mxu0 %v304
    %325 = vmatprep.subr.mxu0 0.0
    %326 = vmatpush1.msra.mxu0 %v305
    %327 = vmatprep.subr.mxu0 0.0
    %328 = vmatpush1.msra.mxu0 %v306
    %329 = vmatprep.subr.mxu0 0.0
    %330 = vmatpush1.msra.mxu0 0.0
    %331 = vmatprep.subr.mxu0 0.0
    %332 = vmatpush1.msra.mxu0 0.0
    %333 = vmatprep.subr.mxu0 0.0
    %334 = vmatpush1.msra.mxu0 0.0
    %335 = vmatprep.subr.mxu0 0.0
    %336 = vmatpush1.msra.mxu0 0.0
    %337 = vmatprep.subr.mxu0 0.0
    %338 = vmatpush1.msra.mxu0 0.0
    %339 = vmatprep.subr.mxu0 0.0
    %340 = vmatpush1.msra.mxu0 0.0
    %341 = vmatprep.subr.mxu0 0.0
    %342 = vmatpush1.msra.mxu0 0.0
    %343 = vmatprep.subr.mxu0 0.0
    %344 = vmatpush1.msra.mxu0 0.0
    %345 = vmatprep.subr.mxu0 0.0
    %346 = vmatpush1.msra.mxu0 0.0
    %347 = vmatprep.subr.mxu0 0.0
    %348 = vmatpush1.msra.mxu0 0.0
    %349 = vmatprep.subr.mxu0 0.0
    %350 = vmatpush1.msra.mxu0 0.0
    %351 = vmatprep.subr.mxu0 0.0
    %352 = vmatpush1.msra.mxu0 0.0
    %353 = vmatprep.subr.mxu0 0.0
    %354 = vmatpush1.msra.mxu0 0.0
    %355 = vmatprep.subr.mxu0 0.0
    %356 = vmatpush1.msra.mxu0 0.0
    %357 = vmatprep.subr.mxu0 0.0
    %358 = vmatpush1.msra.mxu0 0.0
    %359 = vmatprep.subr.mxu0 0.0
    %360 = vmatpush1.msra.mxu0 0.0
    %361 = vmatprep.subr.mxu0 0.0
    %362 = vmatpush1.msra.mxu0 0.0
    %363 = vmatprep.subr.mxu0 0.0
    %364 = vmatpush1.msra.mxu0 0.0
    %365 = vmatprep.subr.mxu0 0.0
    %366 = vmatpush1.msra.mxu0 0.0
    %367 = vmatprep.subr.mxu0 0.0
    %368 = vmatpush1.msra.mxu0 0.0
    %369 = vmatprep.subr.mxu0 0.0
    %370 = vmatpush1.msra.mxu0 0.0
    %371 = vmatprep.subr.mxu0 0.0
    %372 = vmatpush1.msra.mxu0 0.0
    %373 = vmatprep.subr.mxu0 0.0
    %374 = vmatpush1.msra.mxu0 0.0
    %375 = vmatprep.subr.mxu0 0.0
    %376 = vmatpush1.msra.mxu0 0.0
    %377 = vmatprep.subr.mxu0 0.0
    %378 = vmatpush1.msra.mxu0 0.0
    %379 = vmatprep.subr.mxu0 0.0
    %380 = vmatpush1.msra.mxu0 0.0
    %381 = vmatprep.subr.mxu0 0.0
    %382 = vmatpush1.msra.mxu0 0.0
    %383 = vmatprep.subr.mxu0 0.0
    %384 = vmatpush1.msra.mxu0 0.0
    %385 = vmatprep.mubr.f32.mxu0 0.0
    %386 = vmatmul.mubr.f32.gmra.mrb[0].mxu0 %v319
    %v387 = vpop.f32.mrb[0].mxu0
    %v388 = vadd.f32 %v317, %v387
    %v389 = vpop.f32.mrb[0].mxu0
    %390 = vdwg.mxu0
    %391 = vst [vmem:[%s7] sm:$0x1] %v388
    // Predicated region
    $region34: #{_lambda_.1} parent=1 // pred_check
      _
    $region35: #{_lambda_.1} parent=1 // pred_check_branch
      %393 = sbr.rel (0) target = $region37
    $region36: #{_lambda_.1} parent=1 // pred_region
      _
    $region37: #{_lambda_.1} parent=1 // pred_fallthru
      _
    // Predicated region
    $region38: #{_lambda_.1} parent=1 // pred_check
      _
    $region39: #{_lambda_.1} parent=1 // pred_check_branch
      %395 = sbr.rel (0) target = $region41
    $region40: #{_lambda_.1} parent=1 // pred_region
      _
    $region41: #{_lambda_.1} parent=1 // pred_fallthru
      _
    %396 = vsyncpa [#allocation4], 1

</llo_original>
